<compile_context>
chip_gen: v7x
topology: tpu7x:2x2x1
jax: 0.10.0
libtpu: 0.0.40
codegen_flags: <defaults>
</compile_context>

<pallas_src>
import functools

import jax
import jax.numpy as jnp
from jax.experimental import pallas as pl
from jax.experimental.pallas import tpu as pltpu


def _conv_kernel(w_ref, xs_ref, o_ref, *, wo, m):
    """One (batch, cout-tile) step.

    w_ref : (3, CO_T, 9)      bf16   weight, one (CO_T, kw*Cin) matrix per kh
    xs_ref: (1, 2, 9, Lq)     bf16   deinterleaved staging planes (resident per n)
    o_ref : (1, CO_T, M)      out dtype (activation dtype), NCHW-flat
    """
    acc = None
    for kh in range(3):                      # static unroll: 3 stride-free GEMMs
        ph, dh = kh % 2, kh // 2             # row parity / whole-row offset
        start = dh * wo                      # static lane offset into the plane
        rhs = xs_ref[0, ph, :, start:start + m]      # (9, M) zero-copy slice
        part = jnp.dot(w_ref[kh], rhs, preferred_element_type=jnp.float32)
        acc = part if acc is None else acc + part
    o_ref[0] = acc.astype(o_ref.dtype)


def conv2d_mobilenet_stem(x_nchw, weight_oihw, *, stride=2, pad=1):
    """Conv2d(Cin->Cout, 3x3, stride=2, padding=1, bias=False); NCHW in/out."""
    N, Cin, H, W = x_nchw.shape
    Cout, Cin_w, KH, KW = weight_oihw.shape
    assert Cin_w == Cin and (KH, KW, stride, pad) == (3, 3, 2, 1)

    Ho = (H + 2 * pad - KH) // stride + 1
    Wo = (W + 2 * pad - KW) // stride + 1
    M = Ho * Wo
    Hq = Ho + 1                      # rows per H-parity plane (incl. +1 halo row)
    Lq = Hq * Wo
    K = KH * KW * Cin

    # ---- prepass: pad + stride-2 deinterleave, one fused XLA pass, bf16. ----
    # xs[n, ph, kw*Cin + cin, hq*Wo + wo] == xpad[n, cin, 2*hq + ph, 2*wo + kw]
    Hp, Wp = 2 * Hq, 2 * (Wo + 1)
    xp = jnp.pad(x_nchw, ((0, 0), (0, 0),
                          (pad, Hp - H - pad), (pad, Wp - W - pad)))
    planes = [xp[:, :, ph:ph + 2 * Hq:2, kw:kw + 2 * Wo:2]     # (N, Cin, Hq, Wo)
              for ph in range(2) for kw in range(KW)]
    xs = jnp.stack(planes, axis=1).reshape(N, 2, KW * Cin, Lq)
    xs = xs.astype(jnp.bfloat16)

    # weight (O, Cin, KH, KW) -> (KH, O, KW*Cin), matching the staging K-order.
    wt = jnp.transpose(weight_oihw, (2, 0, 3, 1)).reshape(KH, Cout, KW * Cin)
    wt = wt.astype(jnp.bfloat16)

    # >= 2 parallel grid blocks so both v7x TensorCores always get work.
    n_co = 2 if N == 1 else 1
    assert Cout % n_co == 0 and (Cout // n_co) % 8 == 0
    co_t = Cout // n_co

    out_dtype = x_nchw.dtype         # activation dtype: f32 here, bf16 in bf16 models

    cost = pl.CostEstimate(
        flops=2 * N * Cout * M * K,
        transcendentals=0,
        bytes_accessed=int(xs.size) * 2 + int(wt.size) * 2
        + N * Cout * M * jnp.dtype(out_dtype).itemsize,
    )

    kernel = functools.partial(_conv_kernel, wo=Wo, m=M)

    out = pl.pallas_call(
        kernel,
        out_shape=jax.ShapeDtypeStruct((N, Cout, M), out_dtype),
        grid=(N, n_co),
        in_specs=[
            pl.BlockSpec((KH, co_t, KW * Cin), lambda n, c: (0, c, 0)),    # weight
            pl.BlockSpec((1, 2, KW * Cin, Lq), lambda n, c: (n, 0, 0, 0)),  # staging
        ],
        out_specs=pl.BlockSpec((1, co_t, M), lambda n, c: (n, c, 0)),
        compiler_params=pltpu.CompilerParams(
            dimension_semantics=("parallel", "parallel"),
        ),
        cost_estimate=cost,
    )(wt, xs)

    # (N, Cout, M) is already channel-major NCHW; reshape is metadata-only.
    return out.reshape(N, Cout, Ho, Wo)


if __name__ == "__main__":
    key = jax.random.PRNGKey(0)
    kx, kw = jax.random.split(key)

    # Small shapes consistent with the module: NCHW input with 3 channels.
    x = jax.random.normal(kx, (2, 3, 16, 16), dtype=jnp.float32)
    # Deterministic synthetic weights for Conv2d(3, 32, 3, stride=2, pad=1, bias=False).
    w = 0.1 * jax.random.normal(kw, (32, 3, 3, 3), dtype=jnp.float32)

    y = conv2d_mobilenet_stem(x, w)
    y = jax.block_until_ready(y)

    # Sanity check against XLA's native conv (same semantics as the PyTorch layer).
    y_ref = jax.lax.conv_general_dilated(
        x, w, window_strides=(2, 2), padding=((1, 1), (1, 1)),
        dimension_numbers=("NCHW", "OIHW", "NCHW"),
    )
    assert y.shape == (2, 32, 8, 8), y.shape
    # bf16 MXU inputs + f32 accumulation: relaxed tolerance vs the f32 reference.
    assert jnp.allclose(y, y_ref, atol=2e-2, rtol=2e-2), "mismatch vs reference conv"

    print("KERNEL_OK")
</pallas_src>

<mosaic_0001>
module attributes {stable_mosaic.version = 11 : i64} {
  func.func @_conv_kernel(%arg0: i32, %arg1: i32, %arg2: memref<3x32x9xbf16, #tpu.memory_space<vmem>>, %arg3: memref<1x2x9x72xbf16, #tpu.memory_space<vmem>>, %arg4: memref<1x32x64xf32, #tpu.memory_space<vmem>>) attributes {dimension_semantics = [#tpu.dimension_semantics<parallel>, #tpu.dimension_semantics<parallel>], iteration_bounds = array<i64: 2, 1>, scalar_prefetch = 0 : i64, scratch_operands = 0 : i64, tpu.core_type = #tpu.core_type<tc>, window_params = [{transform_indices = @transform_0, window_bounds = array<i64: 3, 32, 9>}, {transform_indices = @transform_1, window_bounds = array<i64: 1, 2, 9, 72>}, {transform_indices = @transform_2, window_bounds = array<i64: 1, 32, 64>}]} {
    %c0 = arith.constant 0 : index
    %c0_0 = arith.constant 0 : index
    %c0_1 = arith.constant 0 : index
    %c0_2 = arith.constant 0 : index
    %0 = vector.load %arg3[%c0, %c0_0, %c0_1, %c0_2] : memref<1x2x9x72xbf16, #tpu.memory_space<vmem>>, vector<1x1x9x64xbf16>
    %1 = vector.shape_cast %0 : vector<1x1x9x64xbf16> to vector<9x64xbf16>
    %c0_3 = arith.constant 0 : index
    %c0_4 = arith.constant 0 : index
    %c0_5 = arith.constant 0 : index
    %2 = vector.load %arg2[%c0_3, %c0_4, %c0_5] : memref<3x32x9xbf16, #tpu.memory_space<vmem>>, vector<1x32x9xbf16>
    %3 = vector.shape_cast %2 : vector<1x32x9xbf16> to vector<32x9xbf16>
    %cst = arith.constant dense<0.000000e+00> : vector<32x64xf32>
    %4 = tpu.matmul %3, %1, %cst {dimension_numbers = #tpu.dot_dimension_numbers<[1], [0], [0], [1], [0, 0, 1, 1], [], []>} : vector<32x9xbf16>, vector<9x64xbf16>, vector<32x64xf32> -> vector<32x64xf32>
    %c0_6 = arith.constant 0 : index
    %c1 = arith.constant 1 : index
    %c0_7 = arith.constant 0 : index
    %c0_8 = arith.constant 0 : index
    %5 = vector.load %arg3[%c0_6, %c1, %c0_7, %c0_8] : memref<1x2x9x72xbf16, #tpu.memory_space<vmem>>, vector<1x1x9x64xbf16>
    %6 = vector.shape_cast %5 : vector<1x1x9x64xbf16> to vector<9x64xbf16>
    %c1_9 = arith.constant 1 : index
    %c0_10 = arith.constant 0 : index
    %c0_11 = arith.constant 0 : index
    %7 = vector.load %arg2[%c1_9, %c0_10, %c0_11] : memref<3x32x9xbf16, #tpu.memory_space<vmem>>, vector<1x32x9xbf16>
    %8 = vector.shape_cast %7 : vector<1x32x9xbf16> to vector<32x9xbf16>
    %cst_12 = arith.constant dense<0.000000e+00> : vector<32x64xf32>
    %9 = tpu.matmul %8, %6, %cst_12 {dimension_numbers = #tpu.dot_dimension_numbers<[1], [0], [0], [1], [0, 0, 1, 1], [], []>} : vector<32x9xbf16>, vector<9x64xbf16>, vector<32x64xf32> -> vector<32x64xf32>
    %10 = arith.addf %4, %9 : vector<32x64xf32>
    %c0_13 = arith.constant 0 : index
    %c0_14 = arith.constant 0 : index
    %c0_15 = arith.constant 0 : index
    %c8 = arith.constant 8 : index
    %11 = vector.load %arg3[%c0_13, %c0_14, %c0_15, %c8] : memref<1x2x9x72xbf16, #tpu.memory_space<vmem>>, vector<1x1x9x64xbf16>
    %12 = vector.shape_cast %11 : vector<1x1x9x64xbf16> to vector<9x64xbf16>
    %c2 = arith.constant 2 : index
    %c0_16 = arith.constant 0 : index
    %c0_17 = arith.constant 0 : index
    %13 = vector.load %arg2[%c2, %c0_16, %c0_17] : memref<3x32x9xbf16, #tpu.memory_space<vmem>>, vector<1x32x9xbf16>
    %14 = vector.shape_cast %13 : vector<1x32x9xbf16> to vector<32x9xbf16>
    %cst_18 = arith.constant dense<0.000000e+00> : vector<32x64xf32>
    %15 = tpu.matmul %14, %12, %cst_18 {dimension_numbers = #tpu.dot_dimension_numbers<[1], [0], [0], [1], [0, 0, 1, 1], [], []>} : vector<32x9xbf16>, vector<9x64xbf16>, vector<32x64xf32> -> vector<32x64xf32>
    %16 = arith.addf %10, %15 : vector<32x64xf32>
    %c0_19 = arith.constant 0 : index
    %c0_20 = arith.constant 0 : index
    %c0_21 = arith.constant 0 : index
    %17 = vector.load %arg4[%c0_19, %c0_20, %c0_21] : memref<1x32x64xf32, #tpu.memory_space<vmem>>, vector<1x32x64xf32>
    %18 = vector.shape_cast %17 : vector<1x32x64xf32> to vector<32x64xf32>
    %19 = vector.shape_cast %16 : vector<32x64xf32> to vector<1x32x64xf32>
    tpu.vector_store %arg4[%c0_19, %c0_20, %c0_21], %19 {strides = array<i32>} : memref<1x32x64xf32, #tpu.memory_space<vmem>>, vector<1x32x64xf32>,
    return
  }
  func.func @transform_0(%arg0: i32, %arg1: i32) -> (i32, i32, i32) {
    %c0_i32 = arith.constant 0 : i32
    %c0_i32_0 = arith.constant 0 : i32
    %c0_i32_1 = arith.constant 0 : i32
    return %c0_i32, %arg1, %c0_i32_0 : i32, i32, i32
  }
  func.func @transform_1(%arg0: i32, %arg1: i32) -> (i32, i32, i32, i32) {
    %c0_i32 = arith.constant 0 : i32
    %c0_i32_0 = arith.constant 0 : i32
    %c0_i32_1 = arith.constant 0 : i32
    %c0_i32_2 = arith.constant 0 : i32
    return %arg0, %c0_i32, %c0_i32_0, %c0_i32_1 : i32, i32, i32, i32
  }
  func.func @transform_2(%arg0: i32, %arg1: i32) -> (i32, i32, i32) {
    %c0_i32 = arith.constant 0 : i32
    %c0_i32_0 = arith.constant 0 : i32
    return %arg0, %arg1, %c0_i32 : i32, i32, i32
  }
}

</mosaic_0001>

<llo_original>
// kernel: tpu_custom_call.1
$region0: #{tpu_custom_call.1}
  #allocation0 [shape = 'u32[]', space=smem, size = 0x4, offset = 0x4, fixed_abs, tag = 'smem constant byte address 0x4 - core index']
  #allocation1 [shape = 'u32[144,128]{1,0:T(1,128)}', space=vmem, size = 0x12000, scoped, tag = 'internal scratch']
  %s0 = inlined_call_operand.vmem [shape: bf16[3,32,9], index: 0, kind: input, shape index: {}]
  %s1 = inlined_call_operand.vmem [shape: bf16[2,2,9,72], index: 1, kind: input, shape index: {}]
  %s2 = inlined_call_operand.hbm [shape: f32[2,32,64], index: 2, kind: output, shape index: {}]
  %s3 = sld [smem:[#allocation0]]
  $region41: #{tpu_custom_call.1} parent=0
    _
  %s5 = ssub.s32 1, %s3
  %s6 = scalar_select 0, %s5, %s3
  $region1: #{tpu_custom_call.1} parent=0
    #allocation2 [shape = 'u8[32768]{0}', space=vmem, size = 0x8000, scoped, tag = 'output window, operand 0']
    #allocation3 [shape = 's32[2]{0}', space=sflag, size = 0x8, scoped, tag = 'scoped memory for tpu_custom_call.1']
    %7 = vsyncpa [#allocation3], 0
    %s8 = scalar_lea.sflag [#allocation3], 1
    %9 = vsyncpa %s8, 0
    loop: start=0, step=1, limit=4
    $region2: #{tpu_custom_call.1} parent=1 // loop_pre_header
      _
    $region3: #{tpu_custom_call.1} parent=1 // loop_header
      %s11 = sphi 0, %s15
      %p12 = scmp.ge.s32.totalorder %s11, 4
      %s18 = sphi 0, %s30
      %s19 = sphi 0, %s26
      %s20 = sphi 0, %s18
      %s21 = sphi 0, %s19
      %s22 = sphi 0, %s20
      %s23 = sphi 0, %s21
      %s33 = sphi 0, %s35
      %s36 = sphi 0, %s33
      %s37 = sphi 0, %s36
      %s53 = sphi 0, %s37
      %s59 = sphi 0, %s61
      %s62 = sphi 0, %s59
      %s63 = sphi 0, %s62
      %s79 = sphi 0, %s63
      %s87 = sphi 0, %s89
      %s90 = sphi 0, %s87
      %s91 = sphi 0, %s90
      %s107 = sphi 0, %s91
    $region4: #{tpu_custom_call.1} parent=1 // loop_header_branch
      %14 = sbr.rel (%p12) target = $region8
    $region5: #{tpu_custom_call.1} parent=1 // loop_body
      %s16 = ssub.s32 %s11, 1
      %s17 = ssub.s32 %s11, 2
      %s24 = sadd.s32 1, %s19
      %p25 = scmp.ge.s32.totalorder %s24, 1
      %s26 = scalar_select %p25, 0, %s24
      %s27 = sadd.s32 1, %s18
      %s28 = scalar_select %p25, %s27, %s18
      %p29 = scmp.ge.s32.totalorder %s28, 2
      %s30 = scalar_select %p29, 0, %s28
      %s31 = ssub.s32 %s19, %s26
      %p32 = scmp.eq.s32.totalorder %s31, 0
      %s34 = sadd.s32 %s33, 1
      %s35 = scalar_select %p32, %s33, %s34
      %p38 = pneg %p32
      %p39 = scmp.eq.s32.totalorder %s11, 1
      %p40 = por %p38, %p39
      %p41 = scmp.ne.s32.totalorder %s33, %s36
      %p42 = scmp.eq.s32.totalorder %s11, 0
      %p43 = por %p41, %p42
      %p44 = scmp.ne.s32.totalorder %s33, %s36
      %p45 = scmp.eq.s32.totalorder %s16, 1
      %p46 = por %p44, %p45
      %p47 = scmp.ne.s32.totalorder %s36, %s37
      %p48 = scmp.eq.s32.totalorder %s16, 0
      %p49 = por %p47, %p48
      %p50 = scmp.ne.s32.totalorder %s36, %s37
      %p51 = scmp.eq.s32.totalorder %s17, 1
      %p52 = por %p50, %p51
      %p54 = scmp.ne.s32.totalorder %s37, %s53
      %p55 = scmp.eq.s32.totalorder %s17, 0
      %p56 = por %p54, %p55
      %s57 = ssub.s32 %s18, %s30
      %p58 = scmp.eq.s32.totalorder %s57, 0
      %s60 = sadd.s32 %s59, 1
      %s61 = scalar_select %p58, %s59, %s60
      %p64 = pneg %p58
      %p65 = scmp.eq.s32.totalorder %s11, 1
      %p66 = por %p64, %p65
      %p67 = scmp.ne.s32.totalorder %s59, %s62
      %p68 = scmp.eq.s32.totalorder %s11, 0
      %p69 = por %p67, %p68
      %p70 = scmp.ne.s32.totalorder %s59, %s62
      %p71 = scmp.eq.s32.totalorder %s16, 1
      %p72 = por %p70, %p71
      %p73 = scmp.ne.s32.totalorder %s62, %s63
      %p74 = scmp.eq.s32.totalorder %s16, 0
      %p75 = por %p73, %p74
      %p76 = scmp.ne.s32.totalorder %s62, %s63
      %p77 = scmp.eq.s32.totalorder %s17, 1
      %p78 = por %p76, %p77
      %p80 = scmp.ne.s32.totalorder %s63, %s79
      %p81 = scmp.eq.s32.totalorder %s17, 0
      %p82 = por %p80, %p81
      %s83 = ssub.s32 %s18, %s30
      %s84 = ssub.s32 %s19, %s26
      %s85 = sor.u32 %s83, %s84
      %p86 = scmp.eq.s32.totalorder %s85, 0
      %s88 = sadd.s32 %s87, 1
      %s89 = scalar_select %p86, %s87, %s88
      %p92 = pneg %p86
      %p93 = scmp.eq.s32.totalorder %s11, 1
      %p94 = por %p92, %p93
      %p95 = scmp.ne.s32.totalorder %s87, %s90
      %p96 = scmp.eq.s32.totalorder %s11, 0
      %p97 = por %p95, %p96
      %p98 = scmp.ne.s32.totalorder %s87, %s90
      %p99 = scmp.eq.s32.totalorder %s16, 1
      %p100 = por %p98, %p99
      %p101 = scmp.ne.s32.totalorder %s90, %s91
      %p102 = scmp.eq.s32.totalorder %s16, 0
      %p103 = por %p101, %p102
      %p104 = scmp.ne.s32.totalorder %s90, %s91
      %p105 = scmp.eq.s32.totalorder %s17, 1
      %p106 = por %p104, %p105
      %p108 = scmp.ne.s32.totalorder %s91, %s107
      %p109 = scmp.eq.s32.totalorder %s17, 0
      %p110 = por %p108, %p109
      %p111 = scmp.le.s32.totalorder 1, %s11
      %p112 = scmp.lt.s32.totalorder %s11, 3
      %p113 = pnand %p111, %p112
      %p114 = pneg %p113
      // Predicated region
      $region9: #{tpu_custom_call.1} parent=5 // pred_check
        _
      $region10: #{tpu_custom_call.1} parent=5 // pred_check_branch
        %116 = sbr.rel (%p113) target = $region12
      $region11: #{tpu_custom_call.1} parent=5 // pred_region
        %s117 = ssub.s32 %s11, 1
        // Predicated region
        $region13: #{tpu_custom_call.1} parent=11 // pred_check
          %p118 = pneg %p49
        $region14: #{tpu_custom_call.1} parent=11 // pred_check_branch
          %120 = sbr.rel (%p118) target = $region16
        $region15: #{tpu_custom_call.1} parent=11 // pred_region
          %s121 = smul.u32 4, %s21
          %p122 = scmp.lt.s32.totalorder %s121, 3
          %s123 = scalar_select %p122, %s121, 3
          %s124 = smul.addr %s123, 4
          %s125 = scalar_lea.vmem %s0, %s124
          %s126 = smul.u32 4, %s21
        $region16: #{tpu_custom_call.1} parent=11 // pred_fallthru
          _
      $region12: #{tpu_custom_call.1} parent=5 // pred_fallthru
        _
      %p127 = scmp.lt.s32.totalorder %s11, 2
      // Predicated region
      $region17: #{tpu_custom_call.1} parent=5 // pred_check
        %p128 = pneg %p127
      $region18: #{tpu_custom_call.1} parent=5 // pred_check_branch
        %130 = sbr.rel (%p128) target = $region20
      $region19: #{tpu_custom_call.1} parent=5 // pred_region
        // Predicated region
        $region21: #{tpu_custom_call.1} parent=19 // pred_check
          %p131 = pneg %p69
        $region22: #{tpu_custom_call.1} parent=19 // pred_check_branch
          %133 = sbr.rel (%p131) target = $region24
        $region23: #{tpu_custom_call.1} parent=19 // pred_region
          %p134 = scmp.lt.s32.totalorder %s18, 1
          %s135 = scalar_select %p134, %s18, 1
          %s136 = smul.addr %s135, 4
          %s137 = smul.addr %s136, 4
          %s138 = scalar_lea.vmem %s1, %s137
        $region24: #{tpu_custom_call.1} parent=19 // pred_fallthru
          _
      $region20: #{tpu_custom_call.1} parent=5 // pred_fallthru
        _
      %p139 = scmp.le.s32.totalorder 1, %s11
      %p140 = scmp.lt.s32.totalorder %s11, 3
      %p141 = pnand %p139, %p140
      %p142 = pneg %p141
      // Predicated region
      $region25: #{tpu_custom_call.1} parent=5 // pred_check
        _
      $region26: #{tpu_custom_call.1} parent=5 // pred_check_branch
        %144 = sbr.rel (%p141) target = $region28
      $region27: #{tpu_custom_call.1} parent=5 // pred_region
        %s145 = ssub.s32 %s11, 1
        %s146 = smul.u32 4, %s21
        %p147 = scmp.lt.s32.totalorder %s146, 3
        %s148 = scalar_select %p147, %s146, 3
        %s149 = smul.addr %s148, 4
        %s150 = scalar_lea.vmem %s0, %s149
        %p151 = pneg %p49
        %p152 = pneg %p46
        %p153 = scmp.lt.s32.totalorder %s20, 1
        %s154 = scalar_select %p153, %s20, 1
        %s155 = smul.addr %s154, 4
        %s156 = smul.addr %s155, 4
        %s157 = scalar_lea.vmem %s1, %s156
        %p158 = pneg %p75
        %p159 = pneg %p72
        %p160 = pneg %p103
        %p161 = pneg %p100
        %s162 = sand.u32 %s90, 1
        %s163 = scalar_lea.sflag [#allocation3], %s162
        %s164 = sand.u32 %s90, 1
        %s165 = smul.addr %s164, 32
        %s166 = scalar_lea.vmem [#allocation2], %s165
        %s167 = smul.u32 4, %s21
        %p168 = scmp.lt.s32.totalorder %s167, 3
        %s169 = scalar_select %p168, %s167, 3
        %s170 = smul.addr %s169, 4
        %s171 = scalar_lea.vmem %s0, %s170
        %s172 = smul.u32 4, %s21
        %p173 = scmp.lt.s32.totalorder %s20, 1
        %s174 = scalar_select %p173, %s20, 1
        %s175 = smul.addr %s174, 4
        %s176 = smul.addr %s175, 4
        %s177 = scalar_lea.vmem %s1, %s176
        %s178 = smul.u32 4, %s21
        %v180 = vld [vmem:[%s177] sm:$0xf]
        %v181 = vld [vmem:[%s177 + $0x4] sm:$0x1]
        %v182 = vld [vmem:[%s171] sm:$0xf]
        %v183 = vld [vmem:[%s171 + $0x4] sm:$0xf]
        %v184 = vld [vmem:[%s171 + $0x8] sm:$0xf]
        %v185 = vld [vmem:[%s171 + $0xc] sm:$0xf]
        %s186 = scalar_lea.vmem %s177, 8
        %v187 = vld [vmem:[%s186] sm:$0xf]
        %v188 = vld [vmem:[%s186 + $0x4] sm:$0x1]
        %s189 = scalar_lea.vmem %s171, 16
        %v190 = vld [vmem:[%s189] sm:$0xf]
        %v191 = vld [vmem:[%s189 + $0x4] sm:$0xf]
        %v192 = vld [vmem:[%s189 + $0x8] sm:$0xf]
        %v193 = vld [vmem:[%s189 + $0xc] sm:$0xf]
        %v198 = vunpack.c.l.b16 %v190
        %v199 = vunpack.c.l.b16 %v191
        %v200 = vunpack.c.l.b16 %v192
        %v201 = vunpack.c.l.b16 %v193
        %v202 = vpack.c.b16 %v199, %v198
        %v203 = vpack.c.b16 %v201, %v200
        %v206 = vunpack.c.l.b16 %v187
        %v207 = vunpack.c.l.b16 %v188
        %v208 = vpack.c.b16 %v207, %v206
        %vm209 = vcmask 72704
        %v211 = vsel %vm209, %v202, 0
        %v214 = vsel %vm209, %v203, 0
        %vm216 = vcmask 1043456
        %vm217 = vcmask 1044480
        %v218 = vsel %vm216, 4294967295, 65535
        %v219 = vsel %vm217, %v218, 0
        %v221 = vand.u32 %v208, %v219
        %223 = vmatprep.subr.bf16.mxu0 0
        %224 = vmatpush1.bf16.msra.mxu0 %v221
        %225 = vmatprep.subr.bf16.mxu0 0
        %226 = vmatpush1.bf16.msra.mxu0 0
        %227 = vmatprep.subr.bf16.mxu0 0
        %228 = vmatpush1.bf16.msra.mxu0 0
        %229 = vmatprep.subr.bf16.mxu0 0
        %230 = vmatpush1.bf16.msra.mxu0 0
        %231 = vmatprep.subr.bf16.mxu0 0
        %232 = vmatpush1.bf16.msra.mxu0 0
        %233 = vmatprep.subr.bf16.mxu0 0
        %234 = vmatpush1.bf16.msra.mxu0 0
        %235 = vmatprep.subr.bf16.mxu0 0
        %236 = vmatpush1.bf16.msra.mxu0 0
        %237 = vmatprep.subr.bf16.mxu0 0
        %238 = vmatpush1.bf16.msra.mxu0 0
        %239 = vmatprep.subr.bf16.mxu0 0
        %240 = vmatpush1.bf16.msra.mxu0 0
        %241 = vmatprep.subr.bf16.mxu0 0
        %242 = vmatpush1.bf16.msra.mxu0 0
        %243 = vmatprep.subr.bf16.mxu0 0
        %244 = vmatpush1.bf16.msra.mxu0 0
        %245 = vmatprep.subr.bf16.mxu0 0
        %246 = vmatpush1.bf16.msra.mxu0 0
        %247 = vmatprep.subr.bf16.mxu0 0
        %248 = vmatpush1.bf16.msra.mxu0 0
        %249 = vmatprep.subr.bf16.mxu0 0
        %250 = vmatpush1.bf16.msra.mxu0 0
        %251 = vmatprep.subr.bf16.mxu0 0
        %252 = vmatpush1.bf16.msra.mxu0 0
        %253 = vmatprep.subr.bf16.mxu0 0
        %254 = vmatpush1.bf16.msra.mxu0 0
        %255 = vmatprep.mubr.bf16.mxu0 0
        %256 = vmatmul.mubr.bf16.gmra.mrb[0].mxu0 %v211
        %v257 = vpop.f32.mrb[0].mxu0
        %v258 = vadd.f32 0.0, %v257
        %v259 = vpop.f32.mrb[0].mxu0
        %v260 = vpop.f32.mrb[0].mxu0
        %v261 = vadd.f32 0.0, %v260
        %v262 = vpop.f32.mrb[0].mxu0
        %263 = vmatprep.mubr.bf16.mxu0 0
        %264 = vmatmul.mubr.bf16.gmra.mrb[0].mxu0 %v214
        %v265 = vpop.f32.mrb[0].mxu0
        %v266 = vadd.f32 0.0, %v265
        %v267 = vpop.f32.mrb[0].mxu0
        %v268 = vpop.f32.mrb[0].mxu0
        %v269 = vadd.f32 0.0, %v268
        %v270 = vpop.f32.mrb[0].mxu0
        %271 = vdwg.mxu0
        %v276 = vunpack.c.l.b16 %v182
        %v277 = vunpack.c.l.b16 %v183
        %v278 = vunpack.c.l.b16 %v184
        %v279 = vunpack.c.l.b16 %v185
        %v280 = vpack.c.b16 %v277, %v276
        %v281 = vpack.c.b16 %v279, %v278
        %v284 = vunpack.c.l.b16 %v180
        %v285 = vunpack.c.l.b16 %v181
        %v286 = vpack.c.b16 %v285, %v284
        %v288 = vsel %vm209, %v280, 0
        %v291 = vsel %vm209, %v281, 0
        %v294 = vand.u32 %v286, %v219
        %296 = vmatprep.subr.bf16.mxu0 0
        %297 = vmatpush1.bf16.msra.mxu0 %v294
        %298 = vmatprep.subr.bf16.mxu0 0
        %299 = vmatpush1.bf16.msra.mxu0 0
        %300 = vmatprep.subr.bf16.mxu0 0
        %301 = vmatpush1.bf16.msra.mxu0 0
        %302 = vmatprep.subr.bf16.mxu0 0
        %303 = vmatpush1.bf16.msra.mxu0 0
        %304 = vmatprep.subr.bf16.mxu0 0
        %305 = vmatpush1.bf16.msra.mxu0 0
        %306 = vmatprep.subr.bf16.mxu0 0
        %307 = vmatpush1.bf16.msra.mxu0 0
        %308 = vmatprep.subr.bf16.mxu0 0
        %309 = vmatpush1.bf16.msra.mxu0 0
        %310 = vmatprep.subr.bf16.mxu0 0
        %311 = vmatpush1.bf16.msra.mxu0 0
        %312 = vmatprep.subr.bf16.mxu0 0
        %313 = vmatpush1.bf16.msra.mxu0 0
        %314 = vmatprep.subr.bf16.mxu0 0
        %315 = vmatpush1.bf16.msra.mxu0 0
        %316 = vmatprep.subr.bf16.mxu0 0
        %317 = vmatpush1.bf16.msra.mxu0 0
        %318 = vmatprep.subr.bf16.mxu0 0
        %319 = vmatpush1.bf16.msra.mxu0 0
        %320 = vmatprep.subr.bf16.mxu0 0
        %321 = vmatpush1.bf16.msra.mxu0 0
        %322 = vmatprep.subr.bf16.mxu0 0
        %323 = vmatpush1.bf16.msra.mxu0 0
        %324 = vmatprep.subr.bf16.mxu0 0
        %325 = vmatpush1.bf16.msra.mxu0 0
        %326 = vmatprep.subr.bf16.mxu0 0
        %327 = vmatpush1.bf16.msra.mxu0 0
        %328 = vmatprep.mubr.bf16.mxu0 0
        %329 = vmatmul.mubr.bf16.gmra.mrb[0].mxu0 %v288
        %v330 = vpop.f32.mrb[0].mxu0
        %v331 = vadd.f32 %v258, %v330
        %v332 = vpop.f32.mrb[0].mxu0
        %v333 = vpop.f32.mrb[0].mxu0
        %v334 = vadd.f32 %v261, %v333
        %v335 = vpop.f32.mrb[0].mxu0
        %336 = vmatprep.mubr.bf16.mxu0 0
        %337 = vmatmul.mubr.bf16.gmra.mrb[0].mxu0 %v291
        %v338 = vpop.f32.mrb[0].mxu0
        %v339 = vadd.f32 %v266, %v338
        %v340 = vpop.f32.mrb[0].mxu0
        %v341 = vpop.f32.mrb[0].mxu0
        %v342 = vadd.f32 %v269, %v341
        %v343 = vpop.f32.mrb[0].mxu0
        %344 = vdwg.mxu0
        %s345 = scalar_lea.vmem %s171, 32
        %v346 = vld [vmem:[%s345] sm:$0xf]
        %v347 = vld [vmem:[%s345 + $0x4] sm:$0xf]
        %v348 = vld [vmem:[%s345 + $0x8] sm:$0xf]
        %v349 = vld [vmem:[%s345 + $0xc] sm:$0xf]
        %v354 = vunpack.c.l.b16 %v346
        %v355 = vunpack.c.l.b16 %v347
        %v356 = vunpack.c.l.b16 %v348
        %v357 = vunpack.c.l.b16 %v349
        %v358 = vpack.c.b16 %v355, %v354
        %v359 = vpack.c.b16 %v357, %v356
        %360 = vrot.lane.b32.xlu0 %v286, 120
        %v361 = vpop.permute.xlu0 %360
        %v363 = vsel %vm209, %v358, 0
        %v366 = vsel %vm209, %v359, 0
        %v369 = vand.u32 %v361, %v219
        %371 = vmatprep.subr.bf16.mxu0 0
        %372 = vmatpush1.bf16.msra.mxu0 %v369
        %373 = vmatprep.subr.bf16.mxu0 0
        %374 = vmatpush1.bf16.msra.mxu0 0
        %375 = vmatprep.subr.bf16.mxu0 0
        %376 = vmatpush1.bf16.msra.mxu0 0
        %377 = vmatprep.subr.bf16.mxu0 0
        %378 = vmatpush1.bf16.msra.mxu0 0
        %379 = vmatprep.subr.bf16.mxu0 0
        %380 = vmatpush1.bf16.msra.mxu0 0
        %381 = vmatprep.subr.bf16.mxu0 0
        %382 = vmatpush1.bf16.msra.mxu0 0
        %383 = vmatprep.subr.bf16.mxu0 0
        %384 = vmatpush1.bf16.msra.mxu0 0
        %385 = vmatprep.subr.bf16.mxu0 0
        %386 = vmatpush1.bf16.msra.mxu0 0
        %387 = vmatprep.subr.bf16.mxu0 0
        %388 = vmatpush1.bf16.msra.mxu0 0
        %389 = vmatprep.subr.bf16.mxu0 0
        %390 = vmatpush1.bf16.msra.mxu0 0
        %391 = vmatprep.subr.bf16.mxu0 0
        %392 = vmatpush1.bf16.msra.mxu0 0
        %393 = vmatprep.subr.bf16.mxu0 0
        %394 = vmatpush1.bf16.msra.mxu0 0
        %395 = vmatprep.subr.bf16.mxu0 0
        %396 = vmatpush1.bf16.msra.mxu0 0
        %397 = vmatprep.subr.bf16.mxu0 0
        %398 = vmatpush1.bf16.msra.mxu0 0
        %399 = vmatprep.subr.bf16.mxu0 0
        %400 = vmatpush1.bf16.msra.mxu0 0
        %401 = vmatprep.subr.bf16.mxu0 0
        %402 = vmatpush1.bf16.msra.mxu0 0
        %403 = vmatprep.mubr.bf16.mxu0 0
        %404 = vmatmul.mubr.bf16.gmra.mrb[0].mxu0 %v363
        %v405 = vpop.f32.mrb[0].mxu0
        %v406 = vadd.f32 0.0, %v405
        %v407 = vpop.f32.mrb[0].mxu0
        %v408 = vpop.f32.mrb[0].mxu0
        %v409 = vadd.f32 0.0, %v408
        %v410 = vpop.f32.mrb[0].mxu0
        %411 = vmatprep.mubr.bf16.mxu0 0
        %412 = vmatmul.mubr.bf16.gmra.mrb[0].mxu0 %v366
        %v413 = vpop.f32.mrb[0].mxu0
        %v414 = vadd.f32 0.0, %v413
        %v415 = vpop.f32.mrb[0].mxu0
        %v416 = vpop.f32.mrb[0].mxu0
        %v417 = vadd.f32 0.0, %v416
        %v418 = vpop.f32.mrb[0].mxu0
        %419 = vdwg.mxu0
        %v420 = vadd.f32 %v331, %v406
        %v421 = vadd.f32 %v334, %v409
        %v422 = vadd.f32 %v339, %v414
        %v423 = vadd.f32 %v342, %v417
        %vm424 = vcmask 523264
        %425 = vst.msk [vmem:[%s166] sm:$0xff] %vm424, %v420
        %426 = vst.msk [vmem:[%s166 + $0x8] sm:$0xff] %vm424, %v421
        %427 = vst.msk [vmem:[%s166 + $0x10] sm:$0xff] %vm424, %v422
        %428 = vst.msk [vmem:[%s166 + $0x18] sm:$0xff] %vm424, %v423
        %s429 = sand.u32 %s90, 1
        %s430 = scalar_lea.sflag [#allocation3], %s429
        %s431 = sand.u32 %s90, 1
        %s432 = smul.addr %s431, 32
        %s433 = scalar_lea.vmem [#allocation2], %s432
        // Predicated region
        $region29: #{tpu_custom_call.1} parent=27 // pred_check
          %p434 = pneg %p100
        $region30: #{tpu_custom_call.1} parent=27 // pred_check_branch
          %436 = sbr.rel (%p434) target = $region32
        $region31: #{tpu_custom_call.1} parent=27 // pred_region
          %s437 = smul.u32 4, %s21
          %s439 = ssub.s32 512, 512
          %440 = vsyncadd %s430, %s439
          %s441 = smul.addr %s20, 4
          %s442 = sadd.s32 %s437, %s441
          %s443 = smul.addr %s442, 128
          %s444 = scalar_lea.hbm %s2, %s443
          %s445 = sshll.u32 %s433, 4
          %s446 = int_to_ptr.vmem [resolvable:$true] %s445
          %451 = dma.vmem_to_hbm [thread:$0]  %s446, 512, %s444, %s430, 128, 128, 8
        $region32: #{tpu_custom_call.1} parent=27 // pred_fallthru
          _
      $region28: #{tpu_custom_call.1} parent=5 // pred_fallthru
        _
      %p452 = scmp.le.s32.totalorder 2, %s11
      // Predicated region
      $region33: #{tpu_custom_call.1} parent=5 // pred_check
        %p453 = pneg %p452
      $region34: #{tpu_custom_call.1} parent=5 // pred_check_branch
        %455 = sbr.rel (%p453) target = $region36
      $region35: #{tpu_custom_call.1} parent=5 // pred_region
        %s456 = ssub.s32 %s11, 2
        // Predicated region
        $region37: #{tpu_custom_call.1} parent=35 // pred_check
          %p457 = pneg %p106
        $region38: #{tpu_custom_call.1} parent=35 // pred_check_branch
          %459 = sbr.rel (%p457) target = $region40
        $region39: #{tpu_custom_call.1} parent=35 // pred_region
          %s460 = sand.u32 %s91, 1
          %s461 = scalar_lea.sflag [#allocation3], %s460
          %s462 = sand.u32 %s91, 1
          %s463 = smul.addr %s462, 32
          %s464 = scalar_lea.vmem [#allocation2], %s463
          %465 = dma.done %s461, 512
        $region40: #{tpu_custom_call.1} parent=35 // pred_fallthru
          _
      $region36: #{tpu_custom_call.1} parent=5 // pred_fallthru
        _
    $region6: #{tpu_custom_call.1} parent=1 // loop_footer
      %s15 = sadd.s32 1, %s11
    $region7: #{tpu_custom_call.1} parent=1 // loop_footer_branch
      %10 = sbr.rel target = $region3
    $region8: #{tpu_custom_call.1} parent=1 // loop_exit
      _
    %466 = vsyncpa [#allocation3], 1
    %s467 = scalar_lea.sflag [#allocation3], 1
    %468 = vsyncpa %s467, 1

</llo_original>
